<compile_context>
chip_gen: v7x
topology: tpu7x:2x2x1
jax: 0.10.0
libtpu: 0.0.40
codegen_flags: <defaults>
</compile_context>

<pallas_src>
import jax
import jax.numpy as jnp
from jax import lax
from jax.experimental import pallas as pl
from jax.experimental.pallas import tpu as pltpu


# ----------------------------------------------------------------------------
# Kernels
#   x:  (S, Cin)      w_t: (Cin, Cout)  (pre-transposed Linear weight)
#   ss: (2, Cout)     row 0 = scale, row 1 = shift
# ----------------------------------------------------------------------------
def _fused_single_block_kernel(x_ref, wt_ref, ss_ref, o_ref):
    # Whole problem resident in VMEM: one MXU pass, fused BN affine + ReLU epilogue.
    acc = jnp.dot(x_ref[...], wt_ref[...], preferred_element_type=jnp.float32)
    y = acc * ss_ref[0:1, :] + ss_ref[1:2, :]
    o_ref[...] = jnp.maximum(y, 0.0).astype(o_ref.dtype)


def _fused_tiled_kernel(x_ref, wt_ref, ss_ref, o_ref, acc_ref):
    k = pl.program_id(2)

    partial = jnp.dot(x_ref[...], wt_ref[...], preferred_element_type=jnp.float32)

    @pl.when(k == 0)
    def _():
        # Write directly: no zero-init + dead accumulate (saves one acc RMW pass).
        acc_ref[...] = partial

    @pl.when(k > 0)
    def _():
        acc_ref[...] += partial

    @pl.when(k == pl.num_programs(2) - 1)
    def _():
        y = acc_ref[...] * ss_ref[0:1, :] + ss_ref[1:2, :]   # fused BN affine
        o_ref[...] = jnp.maximum(y, 0.0).astype(o_ref.dtype)  # fused ReLU


# ----------------------------------------------------------------------------
# Wrapper
# ----------------------------------------------------------------------------
def _pick_tile(dim, candidates):
    for c in candidates:
        if 0 < c <= dim and dim % c == 0:
            return c
    return dim  # full-extent block is always legal


def fused_linear_bn_relu(x, w, scale, shift, *, tm=128, tn=256, tk=512,
                         force_tiled=False, use_bf16_operands=False):
    S, Cin = x.shape
    Cout = w.shape[0]
    out_dtype = x.dtype

    # One-time (trace-time) weight transpose: keeps the MXU RHS in natural layout.
    w_t = jnp.transpose(w)                                   # (Cin, Cout)
    # Pack per-channel affine into a single operand (halves the tiny per-j DMAs).
    ss = jnp.stack([scale.reshape(-1).astype(jnp.float32),
                    shift.reshape(-1).astype(jnp.float32)], axis=0)  # (2, Cout)

    if use_bf16_operands:
        x_in, w_in = x.astype(jnp.bfloat16), w_t.astype(jnp.bfloat16)
    else:
        x_in, w_in = x, w_t

    x_b = jnp.dtype(x_in.dtype).itemsize
    w_b = jnp.dtype(w_in.dtype).itemsize
    o_b = jnp.dtype(out_dtype).itemsize

    # ---------------- single-block fast path (small / overhead-bound shapes) ----
    total_bytes = (S * Cin * x_b + Cin * Cout * w_b + 2 * Cout * 4
                   + S * Cout * o_b + S * Cout * 4)
    if (not force_tiled) and total_bytes <= (20 << 20):
        vmem = int(min(2 * total_bytes + (2 << 20), 48 << 20))
        return pl.pallas_call(
            _fused_single_block_kernel,
            out_shape=jax.ShapeDtypeStruct((S, Cout), out_dtype),
            in_specs=[pl.BlockSpec(memory_space=pltpu.MemorySpace.VMEM)] * 3,
            out_specs=pl.BlockSpec(memory_space=pltpu.MemorySpace.VMEM),
            compiler_params=pltpu.CompilerParams(vmem_limit_bytes=vmem),
        )(x_in, w_in, ss)

    # ---------------- general tiled path ----------------------------------------
    # Grow K first (no acc-vreg / store-width cost), 256-wide N for the 2x256^2 MXU,
    # tm held at 128 to bound accumulator vreg footprint.
    tm = _pick_tile(S, (tm, 256, 128, 64, 32, 16, 8))
    tn = _pick_tile(Cout, (tn, 256, 128))
    tk = _pick_tile(Cin, (tk, 512, 256, 128))
    grid = (S // tm, Cout // tn, Cin // tk)

    # VMEM budget with actual dtype sizes: double-buffered x/W/ss/out + f32 acc.
    vmem = (2 * tm * tk * x_b + 2 * tk * tn * w_b + 2 * 2 * tn * 4
            + 2 * tm * tn * o_b + tm * tn * 4)
    vmem = int(min(max(vmem + (2 << 20), 4 << 20), 48 << 20))

    return pl.pallas_call(
        _fused_tiled_kernel,
        out_shape=jax.ShapeDtypeStruct((S, Cout), out_dtype),
        grid_spec=pltpu.PrefetchScalarGridSpec(
            num_scalar_prefetch=0,
            grid=grid,
            in_specs=[
                pl.BlockSpec((tm, tk), lambda i, j, k: (i, k)),  # x tile
                pl.BlockSpec((tk, tn), lambda i, j, k: (k, j)),  # W^T tile
                pl.BlockSpec((2, tn), lambda i, j, k: (0, j)),   # packed scale/shift
            ],
            out_specs=pl.BlockSpec((tm, tn), lambda i, j, k: (i, j)),
            scratch_shapes=[pltpu.VMEM((tm, tn), jnp.float32)],
        ),
        compiler_params=pltpu.CompilerParams(
            dimension_semantics=("parallel", "parallel", "arbitrary"),
            vmem_limit_bytes=vmem),
    )(x_in, w_in, ss)


# ----------------------------------------------------------------------------
# Full forward pass (mirrors obj_distangler.forward in eval mode)
# ----------------------------------------------------------------------------
def obj_distangler_forward(x, params, *, eps=1e-5, **kw):
    # Fold Linear bias + BatchNorm1d (running stats) into a per-channel affine:
    #   scale = gamma / sqrt(running_var + eps)
    #   shift = (bias - running_mean) * scale + beta
    inv_std = lax.rsqrt(params["running_var"] + eps)
    scale = params["gamma"] * inv_std
    shift = (params["b"] - params["running_mean"]) * scale + params["beta"]
    # F.dropout(x, training=False) -> identity
    return fused_linear_bn_relu(x, params["w"], scale, shift, **kw)


# ----------------------------------------------------------------------------
# Pure-JAX reference for verification (same eval semantics)
# ----------------------------------------------------------------------------
def obj_distangler_reference(x, params, eps=1e-5):
    y = x @ params["w"].T + params["b"]
    y = (y - params["running_mean"]) / jnp.sqrt(params["running_var"] + eps)
    y = y * params["gamma"] + params["beta"]
    return jnp.maximum(y, 0.0)


if __name__ == "__main__":
    B, C = 64, 256  # batch, emd_dim

    key = jax.random.PRNGKey(0)
    kx, kw, kb, kg, kbe, km, kv = jax.random.split(key, 7)

    x = jax.random.normal(kx, (B, C), jnp.float32)
    params = {
        "w": 0.05 * jax.random.normal(kw, (C, C), jnp.float32),          # (Cout, Cin)
        "b": 0.05 * jax.random.normal(kb, (C,), jnp.float32),
        "gamma": 1.0 + 0.1 * jax.random.normal(kg, (C,), jnp.float32),
        "beta": 0.1 * jax.random.normal(kbe, (C,), jnp.float32),
        "running_mean": 0.1 * jax.random.normal(km, (C,), jnp.float32),
        "running_var": jnp.abs(1.0 + 0.1 * jax.random.normal(kv, (C,), jnp.float32)),
    }

    ref = obj_distangler_reference(x, params)

    # 1) Single-block fast path (default for this small shape).
    out_fast = jax.block_until_ready(jax.jit(obj_distangler_forward)(x, params))
    assert out_fast.shape == (B, C)
    assert jnp.allclose(out_fast, ref, atol=1e-4, rtol=1e-4), "fast path mismatch"

    # 2) Tiled path forced with 128-wide tiles -> grid (1, 2, 2), exercises the
    #    k-accumulation and the fused epilogue on the last k step.
    fwd_tiled = jax.jit(lambda xx, pp: obj_distangler_forward(
        xx, pp, force_tiled=True, tm=64, tn=128, tk=128))
    out_tiled = jax.block_until_ready(fwd_tiled(x, params))
    assert out_tiled.shape == (B, C)
    assert jnp.allclose(out_tiled, ref, atol=1e-4, rtol=1e-4), "tiled path mismatch"

    print("KERNEL_OK")
</pallas_src>

<mosaic_0001>
module attributes {stable_mosaic.version = 11 : i64} {
  func.func @_fused_single_block_kernel(%arg0: memref<64x256xf32, #tpu.memory_space<vmem>>, %arg1: memref<256x256xf32, #tpu.memory_space<vmem>>, %arg2: memref<2x256xf32, #tpu.memory_space<vmem>>, %arg3: memref<64x256xf32, #tpu.memory_space<vmem>>) attributes {dimension_semantics = [], scalar_prefetch = 0 : i64, scratch_operands = 0 : i64, tpu.core_type = #tpu.core_type<tc>} {
    %c0 = arith.constant 0 : index
    %c0_0 = arith.constant 0 : index
    %0 = vector.load %arg0[%c0, %c0_0] : memref<64x256xf32, #tpu.memory_space<vmem>>, vector<64x256xf32>
    %c0_1 = arith.constant 0 : index
    %c0_2 = arith.constant 0 : index
    %1 = vector.load %arg1[%c0_1, %c0_2] : memref<256x256xf32, #tpu.memory_space<vmem>>, vector<256x256xf32>
    %cst = arith.constant dense<0.000000e+00> : vector<64x256xf32>
    %2 = tpu.matmul %0, %1, %cst {dimension_numbers = #tpu.dot_dimension_numbers<[1], [0], [0], [1], [0, 0, 1, 1], [], []>} : vector<64x256xf32>, vector<256x256xf32>, vector<64x256xf32> -> vector<64x256xf32>
    %c0_3 = arith.constant 0 : index
    %c0_4 = arith.constant 0 : index
    %3 = vector.load %arg2[%c0_3, %c0_4] : memref<2x256xf32, #tpu.memory_space<vmem>>, vector<1x256xf32>
    %4 = vector.broadcast %3 : vector<1x256xf32> to vector<64x256xf32>
    %5 = arith.mulf %2, %4 : vector<64x256xf32>
    %c1 = arith.constant 1 : index
    %c0_5 = arith.constant 0 : index
    %6 = vector.load %arg2[%c1, %c0_5] : memref<2x256xf32, #tpu.memory_space<vmem>>, vector<1x256xf32>
    %7 = vector.broadcast %6 : vector<1x256xf32> to vector<64x256xf32>
    %8 = arith.addf %5, %7 : vector<64x256xf32>
    %cst_6 = arith.constant 0.000000e+00 : f32
    %9 = vector.broadcast %cst_6 : f32 to vector<64x256xf32>
    %10 = arith.maximumf %8, %9 : vector<64x256xf32>
    %c0_7 = arith.constant 0 : index
    %c0_8 = arith.constant 0 : index
    %11 = vector.load %arg3[%c0_7, %c0_8] : memref<64x256xf32, #tpu.memory_space<vmem>>, vector<64x256xf32>
    tpu.vector_store %arg3[%c0_7, %c0_8], %10 {strides = array<i32>} : memref<64x256xf32, #tpu.memory_space<vmem>>, vector<64x256xf32>,
    return
  }
}

</mosaic_0001>

<llo_original>
// kernel: obj_distangler_forward.1
$region0: #{obj_distangler_forward.1}
  #allocation0 [shape = 'u32[]', space=smem, size = 0x4, offset = 0x4, fixed_abs, tag = 'smem constant byte address 0x4 - core index']
  #allocation1 [shape = 'u32[144,128]{1,0:T(1,128)}', space=vmem, size = 0x12000, scoped, tag = 'internal scratch']
  %s0 = inlined_call_operand.vmem [shape: f32[64,256], index: 0, kind: input, shape index: {}]
  %s1 = inlined_call_operand.vmem [shape: f32[256,256], index: 1, kind: input, shape index: {}]
  %s2 = inlined_call_operand.vmem [shape: f32[2,256], index: 2, kind: input, shape index: {}]
  %s3 = inlined_call_operand.hbm [shape: f32[64,256], index: 3, kind: output, shape index: {}]
  %s4 = sld [smem:[#allocation0]]
  $region22: #{obj_distangler_forward.1} parent=0
    _
  %s6 = ssub.s32 1, %s4
  %s7 = scalar_select 0, %s6, %s4
  $region1: #{obj_distangler_forward.1} parent=0
    #allocation2 [shape = 'u8[65536]{0}', space=vmem, size = 0x10000, scoped, tag = 'output window, operand 0, single buffered']
    #allocation3 [shape = 's32[1]{0}', space=sflag, size = 0x4, scoped, tag = 'scoped memory for obj_distangler_forward.1']
    %8 = vsyncpa [#allocation3], 0
    // Predicated region
    $region2: #{obj_distangler_forward.1} parent=1 // pred_check
      _
    $region3: #{obj_distangler_forward.1} parent=1 // pred_check_branch
      %10 = sbr.rel (0) target = $region5
    $region4: #{obj_distangler_forward.1} parent=1 // pred_region
      _
    $region5: #{obj_distangler_forward.1} parent=1 // pred_fallthru
      _
    // Predicated region
    $region6: #{obj_distangler_forward.1} parent=1 // pred_check
      _
    $region7: #{obj_distangler_forward.1} parent=1 // pred_check_branch
      %12 = sbr.rel (0) target = $region9
    $region8: #{obj_distangler_forward.1} parent=1 // pred_region
      _
    $region9: #{obj_distangler_forward.1} parent=1 // pred_fallthru
      _
    // Predicated region
    $region10: #{obj_distangler_forward.1} parent=1 // pred_check
      _
    $region11: #{obj_distangler_forward.1} parent=1 // pred_check_branch
      %14 = sbr.rel (0) target = $region13
    $region12: #{obj_distangler_forward.1} parent=1 // pred_region
      _
    $region13: #{obj_distangler_forward.1} parent=1 // pred_fallthru
      _
    %v15 = vld [vmem:[%s0] sm:$0xff]
    %v16 = vld [vmem:[%s0 + $0x8] sm:$0xff]
    %v17 = vld [vmem:[%s0 + $0x10] sm:$0xff]
    %v18 = vld [vmem:[%s0 + $0x18] sm:$0xff]
    %v19 = vld [vmem:[%s0 + $0x20] sm:$0xff]
    %v20 = vld [vmem:[%s0 + $0x28] sm:$0xff]
    %v21 = vld [vmem:[%s0 + $0x30] sm:$0xff]
    %v22 = vld [vmem:[%s0 + $0x38] sm:$0xff]
    %v23 = vld [vmem:[%s0 + $0x40] sm:$0xff]
    %v24 = vld [vmem:[%s0 + $0x48] sm:$0xff]
    %v25 = vld [vmem:[%s0 + $0x50] sm:$0xff]
    %v26 = vld [vmem:[%s0 + $0x58] sm:$0xff]
    %v27 = vld [vmem:[%s0 + $0x60] sm:$0xff]
    %v28 = vld [vmem:[%s0 + $0x68] sm:$0xff]
    %v29 = vld [vmem:[%s0 + $0x70] sm:$0xff]
    %v30 = vld [vmem:[%s0 + $0x78] sm:$0xff]
    %v31 = vld [vmem:[%s1] sm:$0xff]
    %v32 = vld [vmem:[%s1 + $0x8] sm:$0xff]
    %v33 = vld [vmem:[%s1 + $0x10] sm:$0xff]
    %v34 = vld [vmem:[%s1 + $0x18] sm:$0xff]
    %v35 = vld [vmem:[%s1 + $0x20] sm:$0xff]
    %v36 = vld [vmem:[%s1 + $0x28] sm:$0xff]
    %v37 = vld [vmem:[%s1 + $0x30] sm:$0xff]
    %v38 = vld [vmem:[%s1 + $0x38] sm:$0xff]
    %v39 = vld [vmem:[%s1 + $0x40] sm:$0xff]
    %v40 = vld [vmem:[%s1 + $0x48] sm:$0xff]
    %v41 = vld [vmem:[%s1 + $0x50] sm:$0xff]
    %v42 = vld [vmem:[%s1 + $0x58] sm:$0xff]
    %v43 = vld [vmem:[%s1 + $0x60] sm:$0xff]
    %v44 = vld [vmem:[%s1 + $0x68] sm:$0xff]
    %v45 = vld [vmem:[%s1 + $0x70] sm:$0xff]
    %v46 = vld [vmem:[%s1 + $0x78] sm:$0xff]
    %v47 = vld [vmem:[%s1 + $0x80] sm:$0xff]
    %v48 = vld [vmem:[%s1 + $0x88] sm:$0xff]
    %v49 = vld [vmem:[%s1 + $0x90] sm:$0xff]
    %v50 = vld [vmem:[%s1 + $0x98] sm:$0xff]
    %v51 = vld [vmem:[%s1 + $0xa0] sm:$0xff]
    %v52 = vld [vmem:[%s1 + $0xa8] sm:$0xff]
    %v53 = vld [vmem:[%s1 + $0xb0] sm:$0xff]
    %v54 = vld [vmem:[%s1 + $0xb8] sm:$0xff]
    %v55 = vld [vmem:[%s1 + $0xc0] sm:$0xff]
    %v56 = vld [vmem:[%s1 + $0xc8] sm:$0xff]
    %v57 = vld [vmem:[%s1 + $0xd0] sm:$0xff]
    %v58 = vld [vmem:[%s1 + $0xd8] sm:$0xff]
    %v59 = vld [vmem:[%s1 + $0xe0] sm:$0xff]
    %v60 = vld [vmem:[%s1 + $0xe8] sm:$0xff]
    %v61 = vld [vmem:[%s1 + $0xf0] sm:$0xff]
    %v62 = vld [vmem:[%s1 + $0xf8] sm:$0xff]
    %v63 = vld [vmem:[%s1 + $0x100] sm:$0xff]
    %v64 = vld [vmem:[%s1 + $0x108] sm:$0xff]
    %v65 = vld [vmem:[%s1 + $0x110] sm:$0xff]
    %v66 = vld [vmem:[%s1 + $0x118] sm:$0xff]
    %v67 = vld [vmem:[%s1 + $0x120] sm:$0xff]
    %v68 = vld [vmem:[%s1 + $0x128] sm:$0xff]
    %v69 = vld [vmem:[%s1 + $0x130] sm:$0xff]
    %v70 = vld [vmem:[%s1 + $0x138] sm:$0xff]
    %v71 = vld [vmem:[%s1 + $0x140] sm:$0xff]
    %v72 = vld [vmem:[%s1 + $0x148] sm:$0xff]
    %v73 = vld [vmem:[%s1 + $0x150] sm:$0xff]
    %v74 = vld [vmem:[%s1 + $0x158] sm:$0xff]
    %v75 = vld [vmem:[%s1 + $0x160] sm:$0xff]
    %v76 = vld [vmem:[%s1 + $0x168] sm:$0xff]
    %v77 = vld [vmem:[%s1 + $0x170] sm:$0xff]
    %v78 = vld [vmem:[%s1 + $0x178] sm:$0xff]
    %v79 = vld [vmem:[%s1 + $0x180] sm:$0xff]
    %v80 = vld [vmem:[%s1 + $0x188] sm:$0xff]
    %v81 = vld [vmem:[%s1 + $0x190] sm:$0xff]
    %v82 = vld [vmem:[%s1 + $0x198] sm:$0xff]
    %v83 = vld [vmem:[%s1 + $0x1a0] sm:$0xff]
    %v84 = vld [vmem:[%s1 + $0x1a8] sm:$0xff]
    %v85 = vld [vmem:[%s1 + $0x1b0] sm:$0xff]
    %v86 = vld [vmem:[%s1 + $0x1b8] sm:$0xff]
    %v87 = vld [vmem:[%s1 + $0x1c0] sm:$0xff]
    %v88 = vld [vmem:[%s1 + $0x1c8] sm:$0xff]
    %v89 = vld [vmem:[%s1 + $0x1d0] sm:$0xff]
    %v90 = vld [vmem:[%s1 + $0x1d8] sm:$0xff]
    %v91 = vld [vmem:[%s1 + $0x1e0] sm:$0xff]
    %v92 = vld [vmem:[%s1 + $0x1e8] sm:$0xff]
    %v93 = vld [vmem:[%s1 + $0x1f0] sm:$0xff]
    %v94 = vld [vmem:[%s1 + $0x1f8] sm:$0xff]
    %95 = vmatprep.subr.mxu0 %v32
    %96 = vmatpush1.msra.mxu0 %v31
    %97 = vmatprep.subr.mxu0 %v34
    %98 = vmatpush1.msra.mxu0 %v33
    %99 = vmatprep.subr.mxu0 %v36
    %100 = vmatpush1.msra.mxu0 %v35
    %101 = vmatprep.subr.mxu0 %v38
    %102 = vmatpush1.msra.mxu0 %v37
    %103 = vmatprep.subr.mxu0 %v40
    %104 = vmatpush1.msra.mxu0 %v39
    %105 = vmatprep.subr.mxu0 %v42
    %106 = vmatpush1.msra.mxu0 %v41
    %107 = vmatprep.subr.mxu0 %v44
    %108 = vmatpush1.msra.mxu0 %v43
    %109 = vmatprep.subr.mxu0 %v46
    %110 = vmatpush1.msra.mxu0 %v45
    %111 = vmatprep.subr.mxu0 %v48
    %112 = vmatpush1.msra.mxu0 %v47
    %113 = vmatprep.subr.mxu0 %v50
    %114 = vmatpush1.msra.mxu0 %v49
    %115 = vmatprep.subr.mxu0 %v52
    %116 = vmatpush1.msra.mxu0 %v51
    %117 = vmatprep.subr.mxu0 %v54
    %118 = vmatpush1.msra.mxu0 %v53
    %119 = vmatprep.subr.mxu0 %v56
    %120 = vmatpush1.msra.mxu0 %v55
    %121 = vmatprep.subr.mxu0 %v58
    %122 = vmatpush1.msra.mxu0 %v57
    %123 = vmatprep.subr.mxu0 %v60
    %124 = vmatpush1.msra.mxu0 %v59
    %125 = vmatprep.subr.mxu0 %v62
    %126 = vmatpush1.msra.mxu0 %v61
    %127 = vmatprep.subr.mxu0 %v64
    %128 = vmatpush1.msra.mxu0 %v63
    %129 = vmatprep.subr.mxu0 %v66
    %130 = vmatpush1.msra.mxu0 %v65
    %131 = vmatprep.subr.mxu0 %v68
    %132 = vmatpush1.msra.mxu0 %v67
    %133 = vmatprep.subr.mxu0 %v70
    %134 = vmatpush1.msra.mxu0 %v69
    %135 = vmatprep.subr.mxu0 %v72
    %136 = vmatpush1.msra.mxu0 %v71
    %137 = vmatprep.subr.mxu0 %v74
    %138 = vmatpush1.msra.mxu0 %v73
    %139 = vmatprep.subr.mxu0 %v76
    %140 = vmatpush1.msra.mxu0 %v75
    %141 = vmatprep.subr.mxu0 %v78
    %142 = vmatpush1.msra.mxu0 %v77
    %143 = vmatprep.subr.mxu0 %v80
    %144 = vmatpush1.msra.mxu0 %v79
    %145 = vmatprep.subr.mxu0 %v82
    %146 = vmatpush1.msra.mxu0 %v81
    %147 = vmatprep.subr.mxu0 %v84
    %148 = vmatpush1.msra.mxu0 %v83
    %149 = vmatprep.subr.mxu0 %v86
    %150 = vmatpush1.msra.mxu0 %v85
    %151 = vmatprep.subr.mxu0 %v88
    %152 = vmatpush1.msra.mxu0 %v87
    %153 = vmatprep.subr.mxu0 %v90
    %154 = vmatpush1.msra.mxu0 %v89
    %155 = vmatprep.subr.mxu0 %v92
    %156 = vmatpush1.msra.mxu0 %v91
    %157 = vmatprep.subr.mxu0 %v94
    %158 = vmatpush1.msra.mxu0 %v93
    %159 = vmatprep.mubr.f32.mxu0 %v16
    %160 = vmatmul.mubr.f32.gmra.mrb[0].mxu0 %v15
    %v161 = vpop.f32.mrb[0].mxu0
    %v162 = vadd.f32 0.0, %v161
    %v163 = vpop.f32.mrb[0].mxu0
    %v164 = vadd.f32 0.0, %v163
    %165 = vmatprep.mubr.f32.mxu0 %v18
    %166 = vmatmul.mubr.f32.gmra.mrb[0].mxu0 %v17
    %v167 = vpop.f32.mrb[0].mxu0
    %v168 = vadd.f32 0.0, %v167
    %v169 = vpop.f32.mrb[0].mxu0
    %v170 = vadd.f32 0.0, %v169
    %171 = vmatprep.mubr.f32.mxu0 %v20
    %172 = vmatmul.mubr.f32.gmra.mrb[0].mxu0 %v19
    %v173 = vpop.f32.mrb[0].mxu0
    %v174 = vadd.f32 0.0, %v173
    %v175 = vpop.f32.mrb[0].mxu0
    %v176 = vadd.f32 0.0, %v175
    %177 = vmatprep.mubr.f32.mxu0 %v22
    %178 = vmatmul.mubr.f32.gmra.mrb[0].mxu0 %v21
    %v179 = vpop.f32.mrb[0].mxu0
    %v180 = vadd.f32 0.0, %v179
    %v181 = vpop.f32.mrb[0].mxu0
    %v182 = vadd.f32 0.0, %v181
    %183 = vmatprep.mubr.f32.mxu0 %v24
    %184 = vmatmul.mubr.f32.gmra.mrb[0].mxu0 %v23
    %v185 = vpop.f32.mrb[0].mxu0
    %v186 = vadd.f32 0.0, %v185
    %v187 = vpop.f32.mrb[0].mxu0
    %v188 = vadd.f32 0.0, %v187
    %189 = vmatprep.mubr.f32.mxu0 %v26
    %190 = vmatmul.mubr.f32.gmra.mrb[0].mxu0 %v25
    %v191 = vpop.f32.mrb[0].mxu0
    %v192 = vadd.f32 0.0, %v191
    %v193 = vpop.f32.mrb[0].mxu0
    %v194 = vadd.f32 0.0, %v193
    %195 = vmatprep.mubr.f32.mxu0 %v28
    %196 = vmatmul.mubr.f32.gmra.mrb[0].mxu0 %v27
    %v197 = vpop.f32.mrb[0].mxu0
    %v198 = vadd.f32 0.0, %v197
    %v199 = vpop.f32.mrb[0].mxu0
    %v200 = vadd.f32 0.0, %v199
    %201 = vmatprep.mubr.f32.mxu0 %v30
    %202 = vmatmul.mubr.f32.gmra.mrb[0].mxu0 %v29
    %v203 = vpop.f32.mrb[0].mxu0
    %v204 = vadd.f32 0.0, %v203
    %v205 = vpop.f32.mrb[0].mxu0
    %v206 = vadd.f32 0.0, %v205
    %207 = vdwg.mxu0
    %v208 = vld [vmem:[%s2] ss:$2 sm:$0x3]
    %v210 = vlaneseq
    %v211 = vshrl.u32 %v210, 7
    %v212 = vsub.s32 0, %v211
    %v213 = vrot.slane %v208, %v212
    %v214 = vlaneseq
    %v215 = vshrl.u32 %v214, 7
    %v216 = vsub.s32 1, %v215
    %v217 = vrot.slane %v208, %v216
    %v220 = vmul.f32 %v162, %v213
    %v221 = vmul.f32 %v164, %v217
    %v222 = vmul.f32 %v168, %v213
    %v223 = vmul.f32 %v170, %v217
    %v224 = vmul.f32 %v174, %v213
    %v225 = vmul.f32 %v176, %v217
    %v226 = vmul.f32 %v180, %v213
    %v227 = vmul.f32 %v182, %v217
    %v228 = vmul.f32 %v186, %v213
    %v229 = vmul.f32 %v188, %v217
    %v230 = vmul.f32 %v192, %v213
    %v231 = vmul.f32 %v194, %v217
    %v232 = vmul.f32 %v198, %v213
    %v233 = vmul.f32 %v200, %v217
    %v234 = vmul.f32 %v204, %v213
    %v235 = vmul.f32 %v206, %v217
    %s236 = scalar_lea.vmem %s2, 1
    %v237 = vld [vmem:[%s236] ss:$2 sm:$0x3]
    %v239 = vlaneseq
    %v240 = vshrl.u32 %v239, 7
    %v241 = vsub.s32 0, %v240
    %v242 = vrot.slane %v237, %v241
    %v243 = vlaneseq
    %v244 = vshrl.u32 %v243, 7
    %v245 = vsub.s32 1, %v244
    %v246 = vrot.slane %v237, %v245
    %v249 = vadd.f32 %v220, %v242
    %v250 = vadd.f32 %v221, %v246
    %v251 = vadd.f32 %v222, %v242
    %v252 = vadd.f32 %v223, %v246
    %v253 = vadd.f32 %v224, %v242
    %v254 = vadd.f32 %v225, %v246
    %v255 = vadd.f32 %v226, %v242
    %v256 = vadd.f32 %v227, %v246
    %v257 = vadd.f32 %v228, %v242
    %v258 = vadd.f32 %v229, %v246
    %v259 = vadd.f32 %v230, %v242
    %v260 = vadd.f32 %v231, %v246
    %v261 = vadd.f32 %v232, %v242
    %v262 = vadd.f32 %v233, %v246
    %v263 = vadd.f32 %v234, %v242
    %v264 = vadd.f32 %v235, %v246
    %v265 = vmax.f32 %v249, 0.0
    %v266 = vmax.f32 %v250, 0.0
    %v267 = vmax.f32 %v251, 0.0
    %v268 = vmax.f32 %v252, 0.0
    %v269 = vmax.f32 %v253, 0.0
    %v270 = vmax.f32 %v254, 0.0
    %v271 = vmax.f32 %v255, 0.0
    %v272 = vmax.f32 %v256, 0.0
    %v273 = vmax.f32 %v257, 0.0
    %v274 = vmax.f32 %v258, 0.0
    %v275 = vmax.f32 %v259, 0.0
    %v276 = vmax.f32 %v260, 0.0
    %v277 = vmax.f32 %v261, 0.0
    %v278 = vmax.f32 %v262, 0.0
    %v279 = vmax.f32 %v263, 0.0
    %v280 = vmax.f32 %v264, 0.0
    %281 = vst [vmem:[#allocation2] sm:$0xff] %v265
    %282 = vst [vmem:[#allocation2 + $0x8] sm:$0xff] %v266
    %283 = vst [vmem:[#allocation2 + $0x10] sm:$0xff] %v267
    %284 = vst [vmem:[#allocation2 + $0x18] sm:$0xff] %v268
    %285 = vst [vmem:[#allocation2 + $0x20] sm:$0xff] %v269
    %286 = vst [vmem:[#allocation2 + $0x28] sm:$0xff] %v270
    %287 = vst [vmem:[#allocation2 + $0x30] sm:$0xff] %v271
    %288 = vst [vmem:[#allocation2 + $0x38] sm:$0xff] %v272
    %289 = vst [vmem:[#allocation2 + $0x40] sm:$0xff] %v273
    %290 = vst [vmem:[#allocation2 + $0x48] sm:$0xff] %v274
    %291 = vst [vmem:[#allocation2 + $0x50] sm:$0xff] %v275
    %292 = vst [vmem:[#allocation2 + $0x58] sm:$0xff] %v276
    %293 = vst [vmem:[#allocation2 + $0x60] sm:$0xff] %v277
    %294 = vst [vmem:[#allocation2 + $0x68] sm:$0xff] %v278
    %295 = vst [vmem:[#allocation2 + $0x70] sm:$0xff] %v279
    %296 = vst [vmem:[#allocation2 + $0x78] sm:$0xff] %v280
    // Predicated region
    $region14: #{obj_distangler_forward.1} parent=1 // pred_check
      _
    $region15: #{obj_distangler_forward.1} parent=1 // pred_check_branch
      %298 = sbr.rel (0) target = $region17
    $region16: #{obj_distangler_forward.1} parent=1 // pred_region
      %s300 = ssub.s32 2048, 2048
      %301 = vsyncadd [#allocation3], %s300
      %s302 = sshll.u32 [#allocation2], 4
      %s303 = int_to_ptr.vmem [resolvable:$true] %s302
      %308 = dma.vmem_to_hbm [thread:$0]  %s303, 2048, %s3, [#allocation3], 256, 256, 16
    $region17: #{obj_distangler_forward.1} parent=1 // pred_fallthru
      _
    // Predicated region
    $region18: #{obj_distangler_forward.1} parent=1 // pred_check
      _
    $region19: #{obj_distangler_forward.1} parent=1 // pred_check_branch
      %310 = sbr.rel (0) target = $region21
    $region20: #{obj_distangler_forward.1} parent=1 // pred_region
      %311 = dma.done [#allocation3], 2048
    $region21: #{obj_distangler_forward.1} parent=1 // pred_fallthru
      _
    %312 = vsyncpa [#allocation3], 1

</llo_original>
